<compile_context>
chip_gen: v6e
topology: v6e:2x2x1
jax: 0.10.0
libtpu: 0.0.40
codegen_flags: <defaults>
</compile_context>

<pallas_src>
import jax
import jax.numpy as jnp
from jax.experimental import pallas as pl
from jax.experimental.pallas import tpu as pltpu


def _fused_linear_add_kernel(x_ref, y_ref, wt_ref, b2_ref, o_ref):
    # wt_ref: (D_in, D_out) (pre-transposed on host); b2_ref: (1, D_out) holding 2*bias.
    s = x_ref[...] + y_ref[...]                                     # VPU add
    acc = jnp.dot(s, wt_ref[...], preferred_element_type=jnp.float32)  # single MXU matmul
    o_ref[...] = (acc + b2_ref[...]).astype(o_ref.dtype)


def _round_up(n: int, m: int) -> int:
    return ((n + m - 1) // m) * m


def mock_model2_forward(x: jax.Array, y: jax.Array,
                        weight: jax.Array, bias: jax.Array) -> jax.Array:
    """Computes fc(x) + fc(y), fc(z) = z @ weight.T + bias, as (x+y) @ weight.T + 2*bias."""
    B, D_in = x.shape
    D_out = weight.shape[0]

    wt = weight.T                          # (D_in, D_out) — MXU-friendly, done once on host
    b2 = (2.0 * bias).reshape(1, D_out)    # fold the doubled bias; 2-D so it tiles cleanly

    # Batch tile selection:
    #  * B <= 1024: single grid step, whole problem resident in VMEM (no per-step overhead).
    #  * larger B: sublane-dense (multiple-of-8) tiles up to 4096 rows, but always at
    #    least 2 grid steps so both v7x TensorCores get work on the 'parallel' axis.
    if B <= 1024:
        tb = B
    else:
        tb = min(_round_up(pl.cdiv(B, 2), 8), 4096)
    grid = (pl.cdiv(B, tb),)

    itemsize = jnp.dtype(x.dtype).itemsize
    cost = pl.CostEstimate(
        flops=2 * B * D_in * D_out,        # one matmul on (x + y)
        transcendentals=0,
        bytes_accessed=(2 * B * D_in + D_in * D_out + D_out + B * D_out) * itemsize,
    )

    return pl.pallas_call(
        _fused_linear_add_kernel,
        out_shape=jax.ShapeDtypeStruct((B, D_out), x.dtype),
        grid=grid,
        in_specs=[
            pl.BlockSpec((tb, D_in), lambda i: (i, 0)),        # x batch tile
            pl.BlockSpec((tb, D_in), lambda i: (i, 0)),        # y batch tile
            pl.BlockSpec((D_in, D_out), lambda i: (0, 0)),     # weight: constant block -> resident
            pl.BlockSpec((1, D_out), lambda i: (0, 0)),        # 2*bias: constant block -> resident
        ],
        out_specs=pl.BlockSpec((tb, D_out), lambda i: (i, 0)),
        compiler_params=pltpu.CompilerParams(
            dimension_semantics=("parallel",),   # independent batch tiles -> v7x 2-TC sharding
        ),
        cost_estimate=cost,
    )(x, y, wt, b2)


if __name__ == "__main__":
    key = jax.random.PRNGKey(0)
    kx, ky, kw, kb = jax.random.split(key, 4)

    B, D = 8, 10  # Linear(10, 10); small batch consistent with the test module
    x = jax.random.normal(kx, (B, D), dtype=jnp.float32)
    y = jax.random.normal(ky, (B, D), dtype=jnp.float32)
    weight = jax.random.normal(kw, (D, D), dtype=jnp.float32) * 0.1   # PyTorch layout (out, in)
    bias = jax.random.normal(kb, (D,), dtype=jnp.float32) * 0.1

    out = mock_model2_forward(x, y, weight, bias)
    out = jax.block_until_ready(out)

    # correctness check against plain JAX reference of fc(x) + fc(y)
    # (fused form differs only by fp32 rounding order; well within tolerance)
    ref = (x @ weight.T + bias) + (y @ weight.T + bias)
    assert out.shape == (B, D)
    assert jnp.allclose(out, ref, atol=1e-5, rtol=1e-5), float(jnp.max(jnp.abs(out - ref)))

    print("KERNEL_OK")
</pallas_src>

<mosaic_0001>
module attributes {stable_mosaic.version = 11 : i64} {
  func.func @_fused_linear_add_kernel(%arg0: i32, %arg1: memref<8x10xf32, #tpu.memory_space<vmem>>, %arg2: memref<8x10xf32, #tpu.memory_space<vmem>>, %arg3: memref<10x10xf32, #tpu.memory_space<vmem>>, %arg4: memref<1x10xf32, #tpu.memory_space<vmem>>, %arg5: memref<8x10xf32, #tpu.memory_space<vmem>>) attributes {dimension_semantics = [#tpu.dimension_semantics<parallel>], iteration_bounds = array<i64: 1>, scalar_prefetch = 0 : i64, scratch_operands = 0 : i64, tpu.core_type = #tpu.core_type<tc>, window_params = [{transform_indices = @transform_0, window_bounds = array<i64: 8, 10>}, {transform_indices = @transform_1, window_bounds = array<i64: 8, 10>}, {pipeline_mode = #tpu.pipeline_mode<synchronous>, transform_indices = @transform_2, window_bounds = array<i64: 10, 10>}, {pipeline_mode = #tpu.pipeline_mode<synchronous>, transform_indices = @transform_3, window_bounds = array<i64: 1, 10>}, {transform_indices = @transform_4, window_bounds = array<i64: 8, 10>}]} {
    %c0 = arith.constant 0 : index
    %c0_0 = arith.constant 0 : index
    %0 = vector.load %arg1[%c0, %c0_0] : memref<8x10xf32, #tpu.memory_space<vmem>>, vector<8x10xf32>
    %c0_1 = arith.constant 0 : index
    %c0_2 = arith.constant 0 : index
    %1 = vector.load %arg2[%c0_1, %c0_2] : memref<8x10xf32, #tpu.memory_space<vmem>>, vector<8x10xf32>
    %2 = arith.addf %0, %1 : vector<8x10xf32>
    %c0_3 = arith.constant 0 : index
    %c0_4 = arith.constant 0 : index
    %3 = vector.load %arg3[%c0_3, %c0_4] : memref<10x10xf32, #tpu.memory_space<vmem>>, vector<10x10xf32>
    %cst = arith.constant dense<0.000000e+00> : vector<8x10xf32>
    %4 = tpu.matmul %2, %3, %cst {dimension_numbers = #tpu.dot_dimension_numbers<[1], [0], [0], [1], [0, 0, 1, 1], [], []>} : vector<8x10xf32>, vector<10x10xf32>, vector<8x10xf32> -> vector<8x10xf32>
    %c0_5 = arith.constant 0 : index
    %c0_6 = arith.constant 0 : index
    %5 = vector.load %arg4[%c0_5, %c0_6] : memref<1x10xf32, #tpu.memory_space<vmem>>, vector<1x10xf32>
    %6 = vector.broadcast %5 : vector<1x10xf32> to vector<8x10xf32>
    %7 = arith.addf %4, %6 : vector<8x10xf32>
    %c0_7 = arith.constant 0 : index
    %c0_8 = arith.constant 0 : index
    %8 = vector.load %arg5[%c0_7, %c0_8] : memref<8x10xf32, #tpu.memory_space<vmem>>, vector<8x10xf32>
    tpu.vector_store %arg5[%c0_7, %c0_8], %7 {strides = array<i32>} : memref<8x10xf32, #tpu.memory_space<vmem>>, vector<8x10xf32>,
    return
  }
  func.func @transform_0(%arg0: i32) -> (i32, i32) {
    %c0_i32 = arith.constant 0 : i32
    %c0_i32_0 = arith.constant 0 : i32
    return %arg0, %c0_i32 : i32, i32
  }
  func.func @transform_1(%arg0: i32) -> (i32, i32) {
    %c0_i32 = arith.constant 0 : i32
    %c0_i32_0 = arith.constant 0 : i32
    return %arg0, %c0_i32 : i32, i32
  }
  func.func @transform_2(%arg0: i32) -> (i32, i32) {
    %c0_i32 = arith.constant 0 : i32
    %c0_i32_0 = arith.constant 0 : i32
    %c0_i32_1 = arith.constant 0 : i32
    return %c0_i32, %c0_i32_0 : i32, i32
  }
  func.func @transform_3(%arg0: i32) -> (i32, i32) {
    %c0_i32 = arith.constant 0 : i32
    %c0_i32_0 = arith.constant 0 : i32
    %c0_i32_1 = arith.constant 0 : i32
    return %c0_i32, %c0_i32_0 : i32, i32
  }
  func.func @transform_4(%arg0: i32) -> (i32, i32) {
    %c0_i32 = arith.constant 0 : i32
    %c0_i32_0 = arith.constant 0 : i32
    return %arg0, %c0_i32 : i32, i32
  }
}

</mosaic_0001>

<llo_original>
// kernel: tpu_custom_call.1
$region0: #{tpu_custom_call.1}
  #allocation0 [shape = 'u32[]', space=smem, size = 0x4, offset = 0x4, fixed_abs, tag = 'smem constant byte address 0x4 - core index']
  #allocation1 [shape = 'u32[144,128]{1,0:T(1,128)}', space=vmem, size = 0x12000, scoped, tag = 'internal scratch']
  %s0 = inlined_call_operand.hbm [shape: f32[8,10], index: 0, kind: input, shape index: {}]
  %s1 = inlined_call_operand.hbm [shape: f32[8,10], index: 1, kind: input, shape index: {}]
  %s2 = inlined_call_operand.hbm [shape: f32[10,10], index: 2, kind: input, shape index: {}]
  %s3 = inlined_call_operand.vmem [shape: f32[1,10], index: 3, kind: input, shape index: {}]
  %s4 = inlined_call_operand.hbm [shape: f32[8,10], index: 4, kind: output, shape index: {}]
  %s5 = sld [smem:[#allocation0]]
  $region38: #{tpu_custom_call.1} parent=0
    _
  %s7 = ssub.s32 1, %s5
  %s8 = scalar_select 0, %s7, %s5
  $region1: #{tpu_custom_call.1} parent=0
    #allocation2 [shape = 'u8[4096]{0}', space=vmem, size = 0x1000, scoped, tag = 'input window, operand 0, single buffered']
    #allocation3 [shape = 's32[1]{0}', space=sflag, size = 0x4, scoped, tag = 'scoped memory for tpu_custom_call.1']
    #allocation4 [shape = 's32[1]{0}', space=sflag, size = 0x4, scoped, tag = 'scoped memory for tpu_custom_call.1']
    #allocation5 [shape = 'u8[4096]{0}', space=vmem, size = 0x1000, scoped, tag = 'input window, operand 1, single buffered']
    #allocation6 [shape = 's32[1]{0}', space=sflag, size = 0x4, scoped, tag = 'scoped memory for tpu_custom_call.1']
    #allocation7 [shape = 'u8[8192]{0}', space=vmem, size = 0x2000, scoped, tag = 'input window, operand 2, single buffered']
    #allocation8 [shape = 'u8[4096]{0}', space=vmem, size = 0x1000, scoped, tag = 'output window, operand 0, single buffered']
    %9 = vsyncpa [#allocation3], 0
    %10 = vsyncpa [#allocation6], 0
    %11 = vsyncpa [#allocation4], 0
    // Predicated region
    $region2: #{tpu_custom_call.1} parent=1 // pred_check
      _
    $region3: #{tpu_custom_call.1} parent=1 // pred_check_branch
      %13 = sbr.rel (0) target = $region5
    $region4: #{tpu_custom_call.1} parent=1 // pred_region
      %s15 = ssub.s32 128, 128
      %16 = vsyncadd [#allocation3], %s15
      %s18 = sshll.u32 [#allocation2], 4
      %s19 = int_to_ptr.vmem [resolvable:$true] %s18
      %21 = dma.hbm_to_vmem [thread:$0]  %s0, 128, %s19, [#allocation3]
    $region5: #{tpu_custom_call.1} parent=1 // pred_fallthru
      _
    // Predicated region
    $region6: #{tpu_custom_call.1} parent=1 // pred_check
      _
    $region7: #{tpu_custom_call.1} parent=1 // pred_check_branch
      %23 = sbr.rel (0) target = $region9
    $region8: #{tpu_custom_call.1} parent=1 // pred_region
      %s25 = ssub.s32 128, 128
      %26 = vsyncadd [#allocation6], %s25
      %s28 = sshll.u32 [#allocation5], 4
      %s29 = int_to_ptr.vmem [resolvable:$true] %s28
      %31 = dma.hbm_to_vmem [thread:$0]  %s1, 128, %s29, [#allocation6]
    $region9: #{tpu_custom_call.1} parent=1 // pred_fallthru
      _
    // Predicated region
    $region10: #{tpu_custom_call.1} parent=1 // pred_check
      _
    $region11: #{tpu_custom_call.1} parent=1 // pred_check_branch
      %33 = sbr.rel (0) target = $region13
    $region12: #{tpu_custom_call.1} parent=1 // pred_region
      %s35 = ssub.s32 256, 256
      %36 = vsyncadd [#allocation6], %s35
      %s37 = sshll.u32 [#allocation7], 4
      %s38 = int_to_ptr.vmem [resolvable:$true] %s37
      %43 = dma.hbm_to_vmem [thread:$0]  %s2, 256, %s38, [#allocation6], 128, 128, 8
    $region13: #{tpu_custom_call.1} parent=1 // pred_fallthru
      _
    // Predicated region
    $region14: #{tpu_custom_call.1} parent=1 // pred_check
      _
    $region15: #{tpu_custom_call.1} parent=1 // pred_check_branch
      %45 = sbr.rel (0) target = $region17
    $region16: #{tpu_custom_call.1} parent=1 // pred_region
      _
    $region17: #{tpu_custom_call.1} parent=1 // pred_fallthru
      _
    // Predicated region
    $region18: #{tpu_custom_call.1} parent=1 // pred_check
      _
    $region19: #{tpu_custom_call.1} parent=1 // pred_check_branch
      %47 = sbr.rel (0) target = $region21
    $region20: #{tpu_custom_call.1} parent=1 // pred_region
      %48 = dma.done [#allocation3], 128
    $region21: #{tpu_custom_call.1} parent=1 // pred_fallthru
      _
    // Predicated region
    $region22: #{tpu_custom_call.1} parent=1 // pred_check
      _
    $region23: #{tpu_custom_call.1} parent=1 // pred_check_branch
      %50 = sbr.rel (0) target = $region25
    $region24: #{tpu_custom_call.1} parent=1 // pred_region
      %51 = dma.done [#allocation6], 128
    $region25: #{tpu_custom_call.1} parent=1 // pred_fallthru
      _
    // Predicated region
    $region26: #{tpu_custom_call.1} parent=1 // pred_check
      _
    $region27: #{tpu_custom_call.1} parent=1 // pred_check_branch
      %53 = sbr.rel (0) target = $region29
    $region28: #{tpu_custom_call.1} parent=1 // pred_region
      %54 = dma.done [#allocation6], 256
    $region29: #{tpu_custom_call.1} parent=1 // pred_fallthru
      _
    %v55 = vld [vmem:[#allocation2] sm:$0xff]
    %v56 = vld [vmem:[#allocation5] sm:$0xff]
    %v57 = vadd.f32 %v55, %v56
    %v58 = vld [vmem:[#allocation7] sm:$0xff]
    %v59 = vld [vmem:[#allocation7 + $0x8] sm:$0x3]
    %v60 = vld [vmem:[%s3] sm:$0x1]
    %v62 = vlaneseq
    %v63 = vshrl.u32 %v62, 7
    %v64 = vsub.s32 0, %v63
    %v65 = vrot.slane %v60, %v64
    %vm67 = vcmask 80896
    %v69 = vsel %vm67, %v57, 0
    %vm71 = vcmask 1041408
    %v73 = vsel %vm71, %v59, 0
    %75 = vmatprep.subr.mxu0 0.0
    %76 = vmatpush1.msra.mxu0 0.0
    %77 = vmatprep.subr.mxu0 0.0
    %78 = vmatpush1.msra.mxu0 0.0
    %79 = vmatprep.subr.mxu0 0.0
    %80 = vmatpush1.msra.mxu0 0.0
    %81 = vmatprep.subr.mxu0 0.0
    %82 = vmatpush1.msra.mxu0 0.0
    %83 = vmatprep.subr.mxu0 0.0
    %84 = vmatpush1.msra.mxu0 0.0
    %85 = vmatprep.subr.mxu0 0.0
    %86 = vmatpush1.msra.mxu0 0.0
    %87 = vmatprep.subr.mxu0 0.0
    %88 = vmatpush1.msra.mxu0 0.0
    %89 = vmatprep.subr.mxu0 0.0
    %90 = vmatpush1.msra.mxu0 0.0
    %91 = vmatprep.subr.mxu0 0.0
    %92 = vmatpush1.msra.mxu0 0.0
    %93 = vmatprep.subr.mxu0 0.0
    %94 = vmatpush1.msra.mxu0 0.0
    %95 = vmatprep.subr.mxu0 0.0
    %96 = vmatpush1.msra.mxu0 0.0
    %97 = vmatprep.subr.mxu0 0.0
    %98 = vmatpush1.msra.mxu0 0.0
    %99 = vmatprep.subr.mxu0 0.0
    %100 = vmatpush1.msra.mxu0 0.0
    %101 = vmatprep.subr.mxu0 0.0
    %102 = vmatpush1.msra.mxu0 0.0
    %103 = vmatprep.subr.mxu0 0.0
    %104 = vmatpush1.msra.mxu0 %v73
    %105 = vmatprep.subr.mxu0 0.0
    %106 = vmatpush1.msra.mxu0 %v58
    %107 = vmatprep.subr.mxu0 0.0
    %108 = vmatpush2.msra.mxu0 0.0
    %109 = vmatprep.subr.mxu0 0.0
    %110 = vmatpush2.msra.mxu0 0.0
    %111 = vmatprep.subr.mxu0 0.0
    %112 = vmatpush2.msra.mxu0 0.0
    %113 = vmatprep.subr.mxu0 0.0
    %114 = vmatpush2.msra.mxu0 0.0
    %115 = vmatprep.subr.mxu0 0.0
    %116 = vmatpush2.msra.mxu0 0.0
    %117 = vmatprep.subr.mxu0 0.0
    %118 = vmatpush2.msra.mxu0 0.0
    %119 = vmatprep.subr.mxu0 0.0
    %120 = vmatpush2.msra.mxu0 0.0
    %121 = vmatprep.subr.mxu0 0.0
    %122 = vmatpush2.msra.mxu0 0.0
    %123 = vmatprep.subr.mxu0 0.0
    %124 = vmatpush2.msra.mxu0 0.0
    %125 = vmatprep.subr.mxu0 0.0
    %126 = vmatpush2.msra.mxu0 0.0
    %127 = vmatprep.subr.mxu0 0.0
    %128 = vmatpush2.msra.mxu0 0.0
    %129 = vmatprep.subr.mxu0 0.0
    %130 = vmatpush2.msra.mxu0 0.0
    %131 = vmatprep.subr.mxu0 0.0
    %132 = vmatpush2.msra.mxu0 0.0
    %133 = vmatprep.subr.mxu0 0.0
    %134 = vmatpush2.msra.mxu0 0.0
    %135 = vmatprep.subr.mxu0 0.0
    %136 = vmatpush2.msra.mxu0 0.0
    %137 = vmatprep.subr.mxu0 0.0
    %138 = vmatpush2.msra.mxu0 0.0
    %139 = vmatprep.mubr.f32.mxu0 0.0
    %140 = vmatmul.mubr.f32.gmra.mxu0 %v69
    %v141 = vpop.f32.mrf.mxu0
    %v142 = vadd.f32 %v65, %v141
    %v143 = vpop.f32.mrf.mxu0
    %144 = vdwg.mxu0
    %145 = vst.msk [vmem:[#allocation8] sm:$0xff] %vm67, %v142
    // Predicated region
    $region30: #{tpu_custom_call.1} parent=1 // pred_check
      _
    $region31: #{tpu_custom_call.1} parent=1 // pred_check_branch
      %147 = sbr.rel (0) target = $region33
    $region32: #{tpu_custom_call.1} parent=1 // pred_region
      %s149 = ssub.s32 128, 128
      %150 = vsyncadd [#allocation4], %s149
      %s152 = sshll.u32 [#allocation8], 4
      %s153 = int_to_ptr.vmem [resolvable:$true] %s152
      %155 = dma.vmem_to_hbm [thread:$0]  %s153, 128, %s4, [#allocation4]
    $region33: #{tpu_custom_call.1} parent=1 // pred_fallthru
      _
    // Predicated region
    $region34: #{tpu_custom_call.1} parent=1 // pred_check
      _
    $region35: #{tpu_custom_call.1} parent=1 // pred_check_branch
      %157 = sbr.rel (0) target = $region37
    $region36: #{tpu_custom_call.1} parent=1 // pred_region
      %158 = dma.done [#allocation4], 128
    $region37: #{tpu_custom_call.1} parent=1 // pred_fallthru
      _
    %159 = vsyncpa [#allocation3], 1
    %160 = vsyncpa [#allocation6], 1
    %161 = vsyncpa [#allocation4], 1

</llo_original>
